<compile_context>
chip_gen: v7x
topology: tpu7x:2x2x1
jax: 0.10.0
libtpu: 0.0.40
codegen_flags: <defaults>
</compile_context>

<pallas_src>
import jax
import jax.numpy as jnp
from jax.experimental import pallas as pl
from jax.experimental.pallas import tpu as pltpu


# ----------------------------- Pallas kernel -------------------------------

def _gcn_fused_kernel(adj_ref, x_ref, pool_ref,
                      w1_ref, b1_ref, w2_ref, b2_ref, w3_ref, b3_ref,
                      w4_ref, b4_ref, w5_ref, b5_ref, w6_ref, b6_ref,
                      o_ref):
    adj = adj_ref[...]                       # (N, N) bf16

    def conv(h_bf16, w_ref, b_ref):
        # XW: (N, Fin) @ (Fin, Fout) -> f32
        xw = jnp.dot(h_bf16, w_ref[...], preferred_element_type=jnp.float32)
        # Â @ XW + b, then ReLU  (f32 accumulation, bf16 MXU operands)
        out = jnp.dot(adj, xw.astype(jnp.bfloat16),
                      preferred_element_type=jnp.float32) + b_ref[...]
        return jnp.maximum(out, 0.0).astype(jnp.bfloat16)

    h = conv(x_ref[...], w1_ref, b1_ref)     # (N, 32)
    h = conv(h, w2_ref, b2_ref)              # (N, 32)
    h = conv(h, w3_ref, b3_ref)              # (N, 128)
    h = conv(h, w4_ref, b4_ref)              # (N, 256)

    # global_mean_pool as matmul: (GP, N) @ (N, 256) -> (GP, 256)
    pooled = jnp.dot(pool_ref[...], h, preferred_element_type=jnp.float32)

    # fc1 + relu
    h1 = jnp.dot(pooled.astype(jnp.bfloat16), w5_ref[...],
                 preferred_element_type=jnp.float32) + b5_ref[...]
    h1 = jnp.maximum(h1, 0.0)

    # fc2 (no activation) -> lane-dense (GP, 128) store
    o_ref[...] = (jnp.dot(h1.astype(jnp.bfloat16), w6_ref[...],
                          preferred_element_type=jnp.float32)
                  + b6_ref[...]).astype(o_ref.dtype)


_VMEM_SPEC = pl.BlockSpec(memory_space=pltpu.MemorySpace.VMEM)


def gcn_forward_fused(adj, x_pad, pool, params):
    """Single fused pallas_call for the entire GCN forward pass."""
    n = adj.shape[0]
    gp = pool.shape[0]

    args = [adj, x_pad, pool]
    for i in range(1, 7):
        args += [params[f"w{i}"], params[f"b{i}"]]

    # Advisory cost estimate: matmul flops + bytes touched.
    flops = 0
    f_in = x_pad.shape[1]
    for i in range(1, 5):
        f_out = params[f"w{i}"].shape[1]
        flops += 2 * n * f_in * f_out + 2 * n * n * f_out
        f_in = f_out
    flops += 2 * gp * n * f_in                       # pool
    f5 = params["w5"].shape[1]
    flops += 2 * gp * f_in * f5                      # fc1
    f6 = params["w6"].shape[1]
    flops += 2 * gp * f5 * f6                        # fc2
    bytes_accessed = sum(int(a.size) * a.dtype.itemsize for a in args) + gp * f6 * 4

    return pl.pallas_call(
        _gcn_fused_kernel,
        out_shape=jax.ShapeDtypeStruct((gp, f6), jnp.float32),
        in_specs=[_VMEM_SPEC] * len(args),
        out_specs=_VMEM_SPEC,
        cost_estimate=pl.CostEstimate(
            flops=flops, transcendentals=0, bytes_accessed=bytes_accessed),
    )(*args)


# ------------------------------- glue (JAX) --------------------------------

def build_norm_adj(edge_index, num_nodes):
    """Â = D^-1/2 (A + I) D^-1/2, with A[dst, src] = 1 for each edge src->dst."""
    src, dst = edge_index[0], edge_index[1]
    a = jnp.zeros((num_nodes, num_nodes), jnp.float32)
    a = a.at[dst, src].set(1.0)
    a = a + jnp.eye(num_nodes, dtype=jnp.float32)     # add self-loops
    deg = a.sum(axis=1)
    dinv = jnp.where(deg > 0, 1.0 / jnp.sqrt(deg), 0.0)
    return (dinv[:, None] * a * dinv[None, :]).astype(jnp.bfloat16)


def build_pool_matrix(batch, num_graphs, pad_graphs):
    """P[g, n] = 1/|V_g| if batch[n] == g; rows padded with zeros to pad_graphs."""
    onehot = (batch[None, :] == jnp.arange(num_graphs)[:, None]).astype(jnp.float32)
    counts = onehot.sum(axis=1, keepdims=True)
    pool = onehot / jnp.maximum(counts, 1.0)
    pool = jnp.pad(pool, ((0, pad_graphs - num_graphs), (0, 0)))
    return pool.astype(jnp.bfloat16)


def init_params(key, in_channels, n_cls):
    """Weights at true PyTorch shapes (f32), then padded/cast for the kernel."""
    dims = [(in_channels, 32), (32, 32), (32, 128), (128, 256), (256, 128), (128, n_cls)]
    raw = {}
    for i, (fi, fo) in enumerate(dims, start=1):
        key, kw = jax.random.split(key)
        scale = 1.0 / jnp.sqrt(jnp.float32(max(fi, 1)))
        raw[f"w{i}"] = jax.random.normal(kw, (fi, fo), jnp.float32) * scale
        raw[f"b{i}"] = jnp.zeros((1, fo), jnp.float32)
    return raw


def prepare_params(raw, in_pad, n_cls_pad):
    """Zero-pad w1 rows to in_pad and w6/b6 cols to n_cls_pad; cast weights to bf16."""
    p = {}
    for i in range(1, 7):
        w = raw[f"w{i}"]
        b = raw[f"b{i}"]
        if i == 1:
            w = jnp.pad(w, ((0, in_pad - w.shape[0]), (0, 0)))
        if i == 6:
            w = jnp.pad(w, ((0, 0), (0, n_cls_pad - w.shape[1])))
            b = jnp.pad(b, ((0, 0), (0, n_cls_pad - b.shape[1])))
        p[f"w{i}"] = w.astype(jnp.bfloat16)
        p[f"b{i}"] = b.astype(jnp.float32)     # biases added in f32
    return p


# --------------------------------- main -------------------------------------

if __name__ == "__main__":
    IN_CHANNELS = 1
    IN_PAD = 8            # pad tiny in_channels dim to a sublane-friendly width
    N_CLS = 10
    N_CLS_PAD = 128       # lane-dense final store; slice back to N_CLS outside
    NODES_PER_GRAPH = 8
    NUM_GRAPHS = 2
    GP = 8                # pool rows padded to 8 (full sublane block)
    N = NODES_PER_GRAPH * NUM_GRAPHS   # 16 nodes total

    key = jax.random.PRNGKey(0)
    key, kx = jax.random.split(key)

    # node features (N, 1), deterministic; zero-pad feature dim to IN_PAD
    x = jax.random.normal(kx, (N, IN_CHANNELS), jnp.float32)
    x_pad = jnp.pad(x, ((0, 0), (0, IN_PAD - IN_CHANNELS))).astype(jnp.bfloat16)

    # simple deterministic graphs: undirected ring within each graph
    src_list, dst_list = [], []
    for g in range(NUM_GRAPHS):
        base = g * NODES_PER_GRAPH
        for i in range(NODES_PER_GRAPH):
            a_node = base + i
            b_node = base + (i + 1) % NODES_PER_GRAPH
            src_list += [a_node, b_node]
            dst_list += [b_node, a_node]
    edge_index = jnp.array([src_list, dst_list], dtype=jnp.int32)
    batch = jnp.repeat(jnp.arange(NUM_GRAPHS, dtype=jnp.int32), NODES_PER_GRAPH)

    adj = build_norm_adj(edge_index, N)                    # (N, N) bf16
    pool = build_pool_matrix(batch, NUM_GRAPHS, GP)        # (GP, N) bf16

    raw_params = init_params(jax.random.PRNGKey(0), IN_CHANNELS, N_CLS)
    params = prepare_params(raw_params, IN_PAD, N_CLS_PAD)

    out_full = gcn_forward_fused(adj, x_pad, pool, params)  # (GP, N_CLS_PAD) f32
    out_full = jax.block_until_ready(out_full)
    out = out_full[:NUM_GRAPHS, :N_CLS]                     # real logits

    assert out_full.shape == (GP, N_CLS_PAD), out_full.shape
    assert out.shape == (NUM_GRAPHS, N_CLS), out.shape
    assert out.dtype == jnp.float32
    print("KERNEL_OK")
</pallas_src>

<mosaic_0001>
module attributes {stable_mosaic.version = 11 : i64} {
  func.func @_gcn_fused_kernel(%arg0: memref<16x16xbf16, #tpu.memory_space<vmem>>, %arg1: memref<16x8xbf16, #tpu.memory_space<vmem>>, %arg2: memref<8x16xbf16, #tpu.memory_space<vmem>>, %arg3: memref<8x32xbf16, #tpu.memory_space<vmem>>, %arg4: memref<1x32xf32, #tpu.memory_space<vmem>>, %arg5: memref<32x32xbf16, #tpu.memory_space<vmem>>, %arg6: memref<1x32xf32, #tpu.memory_space<vmem>>, %arg7: memref<32x128xbf16, #tpu.memory_space<vmem>>, %arg8: memref<1x128xf32, #tpu.memory_space<vmem>>, %arg9: memref<128x256xbf16, #tpu.memory_space<vmem>>, %arg10: memref<1x256xf32, #tpu.memory_space<vmem>>, %arg11: memref<256x128xbf16, #tpu.memory_space<vmem>>, %arg12: memref<1x128xf32, #tpu.memory_space<vmem>>, %arg13: memref<128x128xbf16, #tpu.memory_space<vmem>>, %arg14: memref<1x128xf32, #tpu.memory_space<vmem>>, %arg15: memref<8x128xf32, #tpu.memory_space<vmem>>) attributes {dimension_semantics = [], scalar_prefetch = 0 : i64, scratch_operands = 0 : i64, tpu.core_type = #tpu.core_type<tc>} {
    %c0 = arith.constant 0 : index
    %c0_0 = arith.constant 0 : index
    %0 = vector.load %arg0[%c0, %c0_0] : memref<16x16xbf16, #tpu.memory_space<vmem>>, vector<16x16xbf16>
    %c0_1 = arith.constant 0 : index
    %c0_2 = arith.constant 0 : index
    %1 = vector.load %arg1[%c0_1, %c0_2] : memref<16x8xbf16, #tpu.memory_space<vmem>>, vector<16x8xbf16>
    %c0_3 = arith.constant 0 : index
    %c0_4 = arith.constant 0 : index
    %2 = vector.load %arg3[%c0_3, %c0_4] : memref<8x32xbf16, #tpu.memory_space<vmem>>, vector<8x32xbf16>
    %cst = arith.constant dense<0.000000e+00> : vector<16x32xf32>
    %3 = tpu.matmul %1, %2, %cst {dimension_numbers = #tpu.dot_dimension_numbers<[1], [0], [0], [1], [0, 0, 1, 1], [], []>} : vector<16x8xbf16>, vector<8x32xbf16>, vector<16x32xf32> -> vector<16x32xf32>
    %4 = arith.truncf %3 : vector<16x32xf32> to vector<16x32xbf16>
    %cst_5 = arith.constant dense<0.000000e+00> : vector<16x32xf32>
    %5 = tpu.matmul %0, %4, %cst_5 {dimension_numbers = #tpu.dot_dimension_numbers<[1], [0], [0], [1], [0, 0, 1, 1], [], []>} : vector<16x16xbf16>, vector<16x32xbf16>, vector<16x32xf32> -> vector<16x32xf32>
    %c0_6 = arith.constant 0 : index
    %c0_7 = arith.constant 0 : index
    %6 = vector.load %arg4[%c0_6, %c0_7] : memref<1x32xf32, #tpu.memory_space<vmem>>, vector<1x32xf32>
    %7 = vector.broadcast %6 : vector<1x32xf32> to vector<16x32xf32>
    %8 = arith.addf %5, %7 : vector<16x32xf32>
    %cst_8 = arith.constant 0.000000e+00 : f32
    %9 = vector.broadcast %cst_8 : f32 to vector<16x32xf32>
    %10 = arith.maximumf %8, %9 : vector<16x32xf32>
    %11 = arith.truncf %10 : vector<16x32xf32> to vector<16x32xbf16>
    %c0_9 = arith.constant 0 : index
    %c0_10 = arith.constant 0 : index
    %12 = vector.load %arg5[%c0_9, %c0_10] : memref<32x32xbf16, #tpu.memory_space<vmem>>, vector<32x32xbf16>
    %cst_11 = arith.constant dense<0.000000e+00> : vector<16x32xf32>
    %13 = tpu.matmul %11, %12, %cst_11 {dimension_numbers = #tpu.dot_dimension_numbers<[1], [0], [0], [1], [0, 0, 1, 1], [], []>} : vector<16x32xbf16>, vector<32x32xbf16>, vector<16x32xf32> -> vector<16x32xf32>
    %14 = arith.truncf %13 : vector<16x32xf32> to vector<16x32xbf16>
    %cst_12 = arith.constant dense<0.000000e+00> : vector<16x32xf32>
    %15 = tpu.matmul %0, %14, %cst_12 {dimension_numbers = #tpu.dot_dimension_numbers<[1], [0], [0], [1], [0, 0, 1, 1], [], []>} : vector<16x16xbf16>, vector<16x32xbf16>, vector<16x32xf32> -> vector<16x32xf32>
    %c0_13 = arith.constant 0 : index
    %c0_14 = arith.constant 0 : index
    %16 = vector.load %arg6[%c0_13, %c0_14] : memref<1x32xf32, #tpu.memory_space<vmem>>, vector<1x32xf32>
    %17 = vector.broadcast %16 : vector<1x32xf32> to vector<16x32xf32>
    %18 = arith.addf %15, %17 : vector<16x32xf32>
    %cst_15 = arith.constant 0.000000e+00 : f32
    %19 = vector.broadcast %cst_15 : f32 to vector<16x32xf32>
    %20 = arith.maximumf %18, %19 : vector<16x32xf32>
    %21 = arith.truncf %20 : vector<16x32xf32> to vector<16x32xbf16>
    %c0_16 = arith.constant 0 : index
    %c0_17 = arith.constant 0 : index
    %22 = vector.load %arg7[%c0_16, %c0_17] : memref<32x128xbf16, #tpu.memory_space<vmem>>, vector<32x128xbf16>
    %cst_18 = arith.constant dense<0.000000e+00> : vector<16x128xf32>
    %23 = tpu.matmul %21, %22, %cst_18 {dimension_numbers = #tpu.dot_dimension_numbers<[1], [0], [0], [1], [0, 0, 1, 1], [], []>} : vector<16x32xbf16>, vector<32x128xbf16>, vector<16x128xf32> -> vector<16x128xf32>
    %24 = arith.truncf %23 : vector<16x128xf32> to vector<16x128xbf16>
    %cst_19 = arith.constant dense<0.000000e+00> : vector<16x128xf32>
    %25 = tpu.matmul %0, %24, %cst_19 {dimension_numbers = #tpu.dot_dimension_numbers<[1], [0], [0], [1], [0, 0, 1, 1], [], []>} : vector<16x16xbf16>, vector<16x128xbf16>, vector<16x128xf32> -> vector<16x128xf32>
    %c0_20 = arith.constant 0 : index
    %c0_21 = arith.constant 0 : index
    %26 = vector.load %arg8[%c0_20, %c0_21] : memref<1x128xf32, #tpu.memory_space<vmem>>, vector<1x128xf32>
    %27 = vector.broadcast %26 : vector<1x128xf32> to vector<16x128xf32>
    %28 = arith.addf %25, %27 : vector<16x128xf32>
    %cst_22 = arith.constant 0.000000e+00 : f32
    %29 = vector.broadcast %cst_22 : f32 to vector<16x128xf32>
    %30 = arith.maximumf %28, %29 : vector<16x128xf32>
    %31 = arith.truncf %30 : vector<16x128xf32> to vector<16x128xbf16>
    %c0_23 = arith.constant 0 : index
    %c0_24 = arith.constant 0 : index
    %32 = vector.load %arg9[%c0_23, %c0_24] : memref<128x256xbf16, #tpu.memory_space<vmem>>, vector<128x256xbf16>
    %cst_25 = arith.constant dense<0.000000e+00> : vector<16x256xf32>
    %33 = tpu.matmul %31, %32, %cst_25 {dimension_numbers = #tpu.dot_dimension_numbers<[1], [0], [0], [1], [0, 0, 1, 1], [], []>} : vector<16x128xbf16>, vector<128x256xbf16>, vector<16x256xf32> -> vector<16x256xf32>
    %34 = arith.truncf %33 : vector<16x256xf32> to vector<16x256xbf16>
    %cst_26 = arith.constant dense<0.000000e+00> : vector<16x256xf32>
    %35 = tpu.matmul %0, %34, %cst_26 {dimension_numbers = #tpu.dot_dimension_numbers<[1], [0], [0], [1], [0, 0, 1, 1], [], []>} : vector<16x16xbf16>, vector<16x256xbf16>, vector<16x256xf32> -> vector<16x256xf32>
    %c0_27 = arith.constant 0 : index
    %c0_28 = arith.constant 0 : index
    %36 = vector.load %arg10[%c0_27, %c0_28] : memref<1x256xf32, #tpu.memory_space<vmem>>, vector<1x256xf32>
    %37 = vector.broadcast %36 : vector<1x256xf32> to vector<16x256xf32>
    %38 = arith.addf %35, %37 : vector<16x256xf32>
    %cst_29 = arith.constant 0.000000e+00 : f32
    %39 = vector.broadcast %cst_29 : f32 to vector<16x256xf32>
    %40 = arith.maximumf %38, %39 : vector<16x256xf32>
    %41 = arith.truncf %40 : vector<16x256xf32> to vector<16x256xbf16>
    %c0_30 = arith.constant 0 : index
    %c0_31 = arith.constant 0 : index
    %42 = vector.load %arg2[%c0_30, %c0_31] : memref<8x16xbf16, #tpu.memory_space<vmem>>, vector<8x16xbf16>
    %cst_32 = arith.constant dense<0.000000e+00> : vector<8x256xf32>
    %43 = tpu.matmul %42, %41, %cst_32 {dimension_numbers = #tpu.dot_dimension_numbers<[1], [0], [0], [1], [0, 0, 1, 1], [], []>} : vector<8x16xbf16>, vector<16x256xbf16>, vector<8x256xf32> -> vector<8x256xf32>
    %44 = arith.truncf %43 : vector<8x256xf32> to vector<8x256xbf16>
    %c0_33 = arith.constant 0 : index
    %c0_34 = arith.constant 0 : index
    %45 = vector.load %arg11[%c0_33, %c0_34] : memref<256x128xbf16, #tpu.memory_space<vmem>>, vector<256x128xbf16>
    %cst_35 = arith.constant dense<0.000000e+00> : vector<8x128xf32>
    %46 = tpu.matmul %44, %45, %cst_35 {dimension_numbers = #tpu.dot_dimension_numbers<[1], [0], [0], [1], [0, 0, 1, 1], [], []>} : vector<8x256xbf16>, vector<256x128xbf16>, vector<8x128xf32> -> vector<8x128xf32>
    %c0_36 = arith.constant 0 : index
    %c0_37 = arith.constant 0 : index
    %47 = vector.load %arg12[%c0_36, %c0_37] : memref<1x128xf32, #tpu.memory_space<vmem>>, vector<1x128xf32>
    %48 = vector.broadcast %47 : vector<1x128xf32> to vector<8x128xf32>
    %49 = arith.addf %46, %48 : vector<8x128xf32>
    %cst_38 = arith.constant 0.000000e+00 : f32
    %50 = vector.broadcast %cst_38 : f32 to vector<8x128xf32>
    %51 = arith.maximumf %49, %50 : vector<8x128xf32>
    %52 = arith.truncf %51 : vector<8x128xf32> to vector<8x128xbf16>
    %c0_39 = arith.constant 0 : index
    %c0_40 = arith.constant 0 : index
    %53 = vector.load %arg13[%c0_39, %c0_40] : memref<128x128xbf16, #tpu.memory_space<vmem>>, vector<128x128xbf16>
    %cst_41 = arith.constant dense<0.000000e+00> : vector<8x128xf32>
    %54 = tpu.matmul %52, %53, %cst_41 {dimension_numbers = #tpu.dot_dimension_numbers<[1], [0], [0], [1], [0, 0, 1, 1], [], []>} : vector<8x128xbf16>, vector<128x128xbf16>, vector<8x128xf32> -> vector<8x128xf32>
    %c0_42 = arith.constant 0 : index
    %c0_43 = arith.constant 0 : index
    %55 = vector.load %arg14[%c0_42, %c0_43] : memref<1x128xf32, #tpu.memory_space<vmem>>, vector<1x128xf32>
    %56 = vector.broadcast %55 : vector<1x128xf32> to vector<8x128xf32>
    %57 = arith.addf %54, %56 : vector<8x128xf32>
    %c0_44 = arith.constant 0 : index
    %c0_45 = arith.constant 0 : index
    %58 = vector.load %arg15[%c0_44, %c0_45] : memref<8x128xf32, #tpu.memory_space<vmem>>, vector<8x128xf32>
    tpu.vector_store %arg15[%c0_44, %c0_45], %57 {strides = array<i32>} : memref<8x128xf32, #tpu.memory_space<vmem>>, vector<8x128xf32>,
    return
  }
}

</mosaic_0001>

<llo_original>
// kernel: tpu_custom_call.1
$region0: #{tpu_custom_call.1}
  #allocation0 [shape = 'u32[]', space=smem, size = 0x4, offset = 0x4, fixed_abs, tag = 'smem constant byte address 0x4 - core index']
  #allocation1 [shape = 'u32[144,128]{1,0:T(1,128)}', space=vmem, size = 0x12000, scoped, tag = 'internal scratch']
  %s0 = inlined_call_operand.hbm [shape: bf16[16,16], index: 0, kind: input, shape index: {}]
  %s1 = inlined_call_operand.vmem [shape: bf16[16,8], index: 1, kind: input, shape index: {}]
  %s2 = inlined_call_operand.hbm [shape: bf16[8,16], index: 2, kind: input, shape index: {}]
  %s3 = inlined_call_operand.hbm [shape: bf16[8,32], index: 3, kind: input, shape index: {}]
  %s4 = inlined_call_operand.hbm [shape: f32[1,32], index: 4, kind: input, shape index: {}]
  %s5 = inlined_call_operand.vmem [shape: bf16[32,32], index: 5, kind: input, shape index: {}]
  %s6 = inlined_call_operand.hbm [shape: f32[1,32], index: 6, kind: input, shape index: {}]
  %s7 = inlined_call_operand.vmem [shape: bf16[32,128], index: 7, kind: input, shape index: {}]
  %s8 = inlined_call_operand.vmem [shape: f32[1,128], index: 8, kind: input, shape index: {}]
  %s9 = inlined_call_operand.hbm [shape: bf16[128,256], index: 9, kind: input, shape index: {}]
  %s10 = inlined_call_operand.vmem [shape: f32[1,256], index: 10, kind: input, shape index: {}]
  %s11 = inlined_call_operand.hbm [shape: bf16[256,128], index: 11, kind: input, shape index: {}]
  %s12 = inlined_call_operand.vmem [shape: f32[1,128], index: 12, kind: input, shape index: {}]
  %s13 = inlined_call_operand.hbm [shape: bf16[128,128], index: 13, kind: input, shape index: {}]
  %s14 = inlined_call_operand.vmem [shape: f32[1,128], index: 14, kind: input, shape index: {}]
  %s15 = inlined_call_operand.hbm [shape: f32[8,128], index: 15, kind: output, shape index: {}]
  %s16 = sld [smem:[#allocation0]]
  $region102: #{tpu_custom_call.1} parent=0
    _
  %s18 = ssub.s32 1, %s16
  %s19 = scalar_select 0, %s18, %s16
  $region1: #{tpu_custom_call.1} parent=0
    #allocation2 [shape = 'u8[4096]{0}', space=vmem, size = 0x1000, scoped, tag = 'input window, operand 0, single buffered']
    #allocation3 [shape = 's32[1]{0}', space=sflag, size = 0x4, scoped, tag = 'scoped memory for tpu_custom_call.1']
    #allocation4 [shape = 's32[1]{0}', space=sflag, size = 0x4, scoped, tag = 'scoped memory for tpu_custom_call.1']
    #allocation5 [shape = 'u8[2048]{0}', space=vmem, size = 0x800, scoped, tag = 'input window, operand 2, single buffered']
    #allocation6 [shape = 's32[1]{0}', space=sflag, size = 0x4, scoped, tag = 'scoped memory for tpu_custom_call.1']
    #allocation7 [shape = 'u8[2048]{0}', space=vmem, size = 0x800, scoped, tag = 'input window, operand 3, single buffered']
    #allocation8 [shape = 'u8[512]{0}', space=vmem, size = 0x400, scoped, tag = 'input window, operand 4, single buffered']
    #allocation9 [shape = 's32[1]{0}', space=sflag, size = 0x4, scoped, tag = 'scoped memory for tpu_custom_call.1']
    #allocation10 [shape = 'u8[512]{0}', space=vmem, size = 0x400, scoped, tag = 'input window, operand 6, single buffered']
    #allocation11 [shape = 'u8[65536]{0}', space=vmem, size = 0x10000, scoped, tag = 'input window, operand 9, single buffered']
    #allocation12 [shape = 's32[1]{0}', space=sflag, size = 0x4, scoped, tag = 'scoped memory for tpu_custom_call.1']
    #allocation13 [shape = 'u8[65536]{0}', space=vmem, size = 0x10000, scoped, tag = 'input window, operand 11, single buffered']
    #allocation14 [shape = 'u8[32768]{0}', space=vmem, size = 0x8000, scoped, tag = 'input window, operand 13, single buffered']
    #allocation15 [shape = 's32[1]{0}', space=sflag, size = 0x4, scoped, tag = 'scoped memory for tpu_custom_call.1']
    #allocation16 [shape = 'u8[4096]{0}', space=vmem, size = 0x1000, scoped, tag = 'output window, operand 0, single buffered']
    %20 = vsyncpa [#allocation3], 0
    %21 = vsyncpa [#allocation6], 0
    %22 = vsyncpa [#allocation9], 0
    %23 = vsyncpa [#allocation12], 0
    %24 = vsyncpa [#allocation15], 0
    %25 = vsyncpa [#allocation4], 0
    // Predicated region
    $region2: #{tpu_custom_call.1} parent=1 // pred_check
      _
    $region3: #{tpu_custom_call.1} parent=1 // pred_check_branch
      %27 = sbr.rel (0) target = $region5
    $region4: #{tpu_custom_call.1} parent=1 // pred_region
      %s29 = ssub.s32 128, 128
      %30 = vsyncadd [#allocation3], %s29
      %s31 = sshll.u32 [#allocation2], 4
      %s32 = int_to_ptr.vmem [resolvable:$true] %s31
      %37 = dma.hbm_to_vmem [thread:$0]  %s0, 128, %s32, [#allocation3], 64, 64, 4
    $region5: #{tpu_custom_call.1} parent=1 // pred_fallthru
      _
    // Predicated region
    $region6: #{tpu_custom_call.1} parent=1 // pred_check
      _
    $region7: #{tpu_custom_call.1} parent=1 // pred_check_branch
      %39 = sbr.rel (0) target = $region9
    $region8: #{tpu_custom_call.1} parent=1 // pred_region
      _
    $region9: #{tpu_custom_call.1} parent=1 // pred_fallthru
      _
    // Predicated region
    $region10: #{tpu_custom_call.1} parent=1 // pred_check
      _
    $region11: #{tpu_custom_call.1} parent=1 // pred_check_branch
      %41 = sbr.rel (0) target = $region13
    $region12: #{tpu_custom_call.1} parent=1 // pred_region
      %s43 = ssub.s32 64, 64
      %44 = vsyncadd [#allocation6], %s43
      %s46 = sshll.u32 [#allocation5], 4
      %s47 = int_to_ptr.vmem [resolvable:$true] %s46
      %49 = dma.hbm_to_vmem [thread:$0]  %s2, 64, %s47, [#allocation6]
    $region13: #{tpu_custom_call.1} parent=1 // pred_fallthru
      _
    // Predicated region
    $region14: #{tpu_custom_call.1} parent=1 // pred_check
      _
    $region15: #{tpu_custom_call.1} parent=1 // pred_check_branch
      %51 = sbr.rel (0) target = $region17
    $region16: #{tpu_custom_call.1} parent=1 // pred_region
      %s53 = ssub.s32 64, 64
      %54 = vsyncadd [#allocation6], %s53
      %s56 = sshll.u32 [#allocation7], 4
      %s57 = int_to_ptr.vmem [resolvable:$true] %s56
      %59 = dma.hbm_to_vmem [thread:$0]  %s3, 64, %s57, [#allocation6]
    $region17: #{tpu_custom_call.1} parent=1 // pred_fallthru
      _
    // Predicated region
    $region18: #{tpu_custom_call.1} parent=1 // pred_check
      _
    $region19: #{tpu_custom_call.1} parent=1 // pred_check_branch
      %61 = sbr.rel (0) target = $region21
    $region20: #{tpu_custom_call.1} parent=1 // pred_region
      %s63 = ssub.s32 16, 16
      %64 = vsyncadd [#allocation9], %s63
      %s66 = sshll.u32 [#allocation8], 4
      %s67 = int_to_ptr.vmem [resolvable:$true] %s66
      %69 = dma.hbm_to_vmem [thread:$0]  %s4, 16, %s67, [#allocation9]
    $region21: #{tpu_custom_call.1} parent=1 // pred_fallthru
      _
    // Predicated region
    $region22: #{tpu_custom_call.1} parent=1 // pred_check
      _
    $region23: #{tpu_custom_call.1} parent=1 // pred_check_branch
      %71 = sbr.rel (0) target = $region25
    $region24: #{tpu_custom_call.1} parent=1 // pred_region
      _
    $region25: #{tpu_custom_call.1} parent=1 // pred_fallthru
      _
    // Predicated region
    $region26: #{tpu_custom_call.1} parent=1 // pred_check
      _
    $region27: #{tpu_custom_call.1} parent=1 // pred_check_branch
      %73 = sbr.rel (0) target = $region29
    $region28: #{tpu_custom_call.1} parent=1 // pred_region
      %s75 = ssub.s32 16, 16
      %76 = vsyncadd [#allocation9], %s75
      %s78 = sshll.u32 [#allocation10], 4
      %s79 = int_to_ptr.vmem [resolvable:$true] %s78
      %81 = dma.hbm_to_vmem [thread:$0]  %s6, 16, %s79, [#allocation9]
    $region29: #{tpu_custom_call.1} parent=1 // pred_fallthru
      _
    // Predicated region
    $region30: #{tpu_custom_call.1} parent=1 // pred_check
      _
    $region31: #{tpu_custom_call.1} parent=1 // pred_check_branch
      %83 = sbr.rel (0) target = $region33
    $region32: #{tpu_custom_call.1} parent=1 // pred_region
      _
    $region33: #{tpu_custom_call.1} parent=1 // pred_fallthru
      _
    // Predicated region
    $region34: #{tpu_custom_call.1} parent=1 // pred_check
      _
    $region35: #{tpu_custom_call.1} parent=1 // pred_check_branch
      %85 = sbr.rel (0) target = $region37
    $region36: #{tpu_custom_call.1} parent=1 // pred_region
      _
    $region37: #{tpu_custom_call.1} parent=1 // pred_fallthru
      _
    // Predicated region
    $region38: #{tpu_custom_call.1} parent=1 // pred_check
      _
    $region39: #{tpu_custom_call.1} parent=1 // pred_check_branch
      %87 = sbr.rel (0) target = $region41
    $region40: #{tpu_custom_call.1} parent=1 // pred_region
      %s89 = ssub.s32 2048, 2048
      %90 = vsyncadd [#allocation12], %s89
      %s91 = sshll.u32 [#allocation11], 4
      %s92 = int_to_ptr.vmem [resolvable:$true] %s91
      %97 = dma.hbm_to_vmem [thread:$0]  %s9, 2048, %s92, [#allocation12], 128, 128, 8
    $region41: #{tpu_custom_call.1} parent=1 // pred_fallthru
      _
    // Predicated region
    $region42: #{tpu_custom_call.1} parent=1 // pred_check
      _
    $region43: #{tpu_custom_call.1} parent=1 // pred_check_branch
      %99 = sbr.rel (0) target = $region45
    $region44: #{tpu_custom_call.1} parent=1 // pred_region
      _
    $region45: #{tpu_custom_call.1} parent=1 // pred_fallthru
      _
    // Predicated region
    $region46: #{tpu_custom_call.1} parent=1 // pred_check
      _
    $region47: #{tpu_custom_call.1} parent=1 // pred_check_branch
      %101 = sbr.rel (0) target = $region49
    $region48: #{tpu_custom_call.1} parent=1 // pred_region
      %s103 = ssub.s32 2048, 2048
      %104 = vsyncadd [#allocation12], %s103
      %s105 = sshll.u32 [#allocation13], 4
      %s106 = int_to_ptr.vmem [resolvable:$true] %s105
      %111 = dma.hbm_to_vmem [thread:$0]  %s11, 2048, %s106, [#allocation12], 64, 64, 4
    $region49: #{tpu_custom_call.1} parent=1 // pred_fallthru
      _
    // Predicated region
    $region50: #{tpu_custom_call.1} parent=1 // pred_check
      _
    $region51: #{tpu_custom_call.1} parent=1 // pred_check_branch
      %113 = sbr.rel (0) target = $region53
    $region52: #{tpu_custom_call.1} parent=1 // pred_region
      _
    $region53: #{tpu_custom_call.1} parent=1 // pred_fallthru
      _
    // Predicated region
    $region54: #{tpu_custom_call.1} parent=1 // pred_check
      _
    $region55: #{tpu_custom_call.1} parent=1 // pred_check_branch
      %115 = sbr.rel (0) target = $region57
    $region56: #{tpu_custom_call.1} parent=1 // pred_region
      %s117 = ssub.s32 1024, 1024
      %118 = vsyncadd [#allocation15], %s117
      %s119 = sshll.u32 [#allocation14], 4
      %s120 = int_to_ptr.vmem [resolvable:$true] %s119
      %125 = dma.hbm_to_vmem [thread:$0]  %s13, 1024, %s120, [#allocation15], 64, 64, 4
    $region57: #{tpu_custom_call.1} parent=1 // pred_fallthru
      _
    // Predicated region
    $region58: #{tpu_custom_call.1} parent=1 // pred_check
      _
    $region59: #{tpu_custom_call.1} parent=1 // pred_check_branch
      %127 = sbr.rel (0) target = $region61
    $region60: #{tpu_custom_call.1} parent=1 // pred_region
      _
    $region61: #{tpu_custom_call.1} parent=1 // pred_fallthru
      _
    // Predicated region
    $region62: #{tpu_custom_call.1} parent=1 // pred_check
      _
    $region63: #{tpu_custom_call.1} parent=1 // pred_check_branch
      %129 = sbr.rel (0) target = $region65
    $region64: #{tpu_custom_call.1} parent=1 // pred_region
      %130 = dma.done [#allocation3], 128
    $region65: #{tpu_custom_call.1} parent=1 // pred_fallthru
      _
    // Predicated region
    $region66: #{tpu_custom_call.1} parent=1 // pred_check
      _
    $region67: #{tpu_custom_call.1} parent=1 // pred_check_branch
      %132 = sbr.rel (0) target = $region69
    $region68: #{tpu_custom_call.1} parent=1 // pred_region
      %133 = dma.done [#allocation6], 64
    $region69: #{tpu_custom_call.1} parent=1 // pred_fallthru
      _
    // Predicated region
    $region70: #{tpu_custom_call.1} parent=1 // pred_check
      _
    $region71: #{tpu_custom_call.1} parent=1 // pred_check_branch
      %135 = sbr.rel (0) target = $region73
    $region72: #{tpu_custom_call.1} parent=1 // pred_region
      %136 = dma.done [#allocation6], 64
    $region73: #{tpu_custom_call.1} parent=1 // pred_fallthru
      _
    // Predicated region
    $region74: #{tpu_custom_call.1} parent=1 // pred_check
      _
    $region75: #{tpu_custom_call.1} parent=1 // pred_check_branch
      %138 = sbr.rel (0) target = $region77
    $region76: #{tpu_custom_call.1} parent=1 // pred_region
      %139 = dma.done [#allocation9], 16
    $region77: #{tpu_custom_call.1} parent=1 // pred_fallthru
      _
    // Predicated region
    $region78: #{tpu_custom_call.1} parent=1 // pred_check
      _
    $region79: #{tpu_custom_call.1} parent=1 // pred_check_branch
      %141 = sbr.rel (0) target = $region81
    $region80: #{tpu_custom_call.1} parent=1 // pred_region
      %142 = dma.done [#allocation9], 16
    $region81: #{tpu_custom_call.1} parent=1 // pred_fallthru
      _
    // Predicated region
    $region82: #{tpu_custom_call.1} parent=1 // pred_check
      _
    $region83: #{tpu_custom_call.1} parent=1 // pred_check_branch
      %144 = sbr.rel (0) target = $region85
    $region84: #{tpu_custom_call.1} parent=1 // pred_region
      %145 = dma.done [#allocation12], 2048
    $region85: #{tpu_custom_call.1} parent=1 // pred_fallthru
      _
    // Predicated region
    $region86: #{tpu_custom_call.1} parent=1 // pred_check
      _
    $region87: #{tpu_custom_call.1} parent=1 // pred_check_branch
      %147 = sbr.rel (0) target = $region89
    $region88: #{tpu_custom_call.1} parent=1 // pred_region
      %148 = dma.done [#allocation12], 2048
    $region89: #{tpu_custom_call.1} parent=1 // pred_fallthru
      _
    // Predicated region
    $region90: #{tpu_custom_call.1} parent=1 // pred_check
      _
    $region91: #{tpu_custom_call.1} parent=1 // pred_check_branch
      %150 = sbr.rel (0) target = $region93
    $region92: #{tpu_custom_call.1} parent=1 // pred_region
      %151 = dma.done [#allocation15], 1024
    $region93: #{tpu_custom_call.1} parent=1 // pred_fallthru
      _
    %v153 = vld [vmem:[#allocation2] sm:$0xf]
    %v154 = vld [vmem:[#allocation2 + $0x4] sm:$0xf]
    %v155 = vld [vmem:[%s1] sm:$0xf]
    %v156 = vld [vmem:[%s1 + $0x4] sm:$0xf]
    %v157 = vld [vmem:[#allocation7] sm:$0xf]
    %v160 = vunpack.c.l.b16 %v155
    %v161 = vunpack.c.l.b16 %v156
    %v162 = vpack.c.b16 %v161, %v160
    %vm163 = vcmask 64512
    %v165 = vsel %vm163, %v162, 0
    %vm167 = vcmask 1043456
    %v169 = vsel %vm167, %v157, 0
    %171 = vmatprep.subr.bf16.mxu0 0
    %172 = vmatpush1.bf16.msra.mxu0 %v169
    %173 = vmatprep.subr.bf16.mxu0 0
    %174 = vmatpush1.bf16.msra.mxu0 0
    %175 = vmatprep.subr.bf16.mxu0 0
    %176 = vmatpush1.bf16.msra.mxu0 0
    %177 = vmatprep.subr.bf16.mxu0 0
    %178 = vmatpush1.bf16.msra.mxu0 0
    %179 = vmatprep.subr.bf16.mxu0 0
    %180 = vmatpush1.bf16.msra.mxu0 0
    %181 = vmatprep.subr.bf16.mxu0 0
    %182 = vmatpush1.bf16.msra.mxu0 0
    %183 = vmatprep.subr.bf16.mxu0 0
    %184 = vmatpush1.bf16.msra.mxu0 0
    %185 = vmatprep.subr.bf16.mxu0 0
    %186 = vmatpush1.bf16.msra.mxu0 0
    %187 = vmatprep.subr.bf16.mxu0 0
    %188 = vmatpush1.bf16.msra.mxu0 0
    %189 = vmatprep.subr.bf16.mxu0 0
    %190 = vmatpush1.bf16.msra.mxu0 0
    %191 = vmatprep.subr.bf16.mxu0 0
    %192 = vmatpush1.bf16.msra.mxu0 0
    %193 = vmatprep.subr.bf16.mxu0 0
    %194 = vmatpush1.bf16.msra.mxu0 0
    %195 = vmatprep.subr.bf16.mxu0 0
    %196 = vmatpush1.bf16.msra.mxu0 0
    %197 = vmatprep.subr.bf16.mxu0 0
    %198 = vmatpush1.bf16.msra.mxu0 0
    %199 = vmatprep.subr.bf16.mxu0 0
    %200 = vmatpush1.bf16.msra.mxu0 0
    %201 = vmatprep.subr.bf16.mxu0 0
    %202 = vmatpush1.bf16.msra.mxu0 0
    %203 = vmatprep.mubr.bf16.mxu0 0
    %204 = vmatmul.mubr.bf16.gmra.mrb[0].mxu0 %v165
    %v205 = vpop.f32.mrb[0].mxu0
    %v206 = vadd.f32 0.0, %v205
    %v207 = vpop.f32.mrb[0].mxu0
    %v208 = vpop.f32.mrb[0].mxu0
    %v209 = vadd.f32 0.0, %v208
    %v210 = vpop.f32.mrb[0].mxu0
    %211 = vdwg.mxu0
    %v212 = vpack.c.bf16 %v209, %v206
    %v213 = vld [vmem:[#allocation8] sm:$0x1]
    %v215 = vlaneseq
    %v216 = vshrl.u32 %v215, 7
    %v217 = vsub.s32 0, %v216
    %v218 = vrot.slane %v213, %v217
    %v222 = vunpack.c.l.b16 %v153
    %v223 = vunpack.c.l.b16 %v154
    %v224 = vpack.c.b16 %v223, %v222
    %vm225 = vcmask 130048
    %v227 = vsel %vm225, %v224, 0
    %229 = vmatprep.subr.bf16.mxu0 0
    %230 = vmatpush1.bf16.msra.mxu0 %v212
    %231 = vmatprep.subr.bf16.mxu0 0
    %232 = vmatpush1.bf16.msra.mxu0 0
    %233 = vmatprep.subr.bf16.mxu0 0
    %234 = vmatpush1.bf16.msra.mxu0 0
    %235 = vmatprep.subr.bf16.mxu0 0
    %236 = vmatpush1.bf16.msra.mxu0 0
    %237 = vmatprep.subr.bf16.mxu0 0
    %238 = vmatpush1.bf16.msra.mxu0 0
    %239 = vmatprep.subr.bf16.mxu0 0
    %240 = vmatpush1.bf16.msra.mxu0 0
    %241 = vmatprep.subr.bf16.mxu0 0
    %242 = vmatpush1.bf16.msra.mxu0 0
    %243 = vmatprep.subr.bf16.mxu0 0
    %244 = vmatpush1.bf16.msra.mxu0 0
    %245 = vmatprep.subr.bf16.mxu0 0
    %246 = vmatpush1.bf16.msra.mxu0 0
    %247 = vmatprep.subr.bf16.mxu0 0
    %248 = vmatpush1.bf16.msra.mxu0 0
    %249 = vmatprep.subr.bf16.mxu0 0
    %250 = vmatpush1.bf16.msra.mxu0 0
    %251 = vmatprep.subr.bf16.mxu0 0
    %252 = vmatpush1.bf16.msra.mxu0 0
    %253 = vmatprep.subr.bf16.mxu0 0
    %254 = vmatpush1.bf16.msra.mxu0 0
    %255 = vmatprep.subr.bf16.mxu0 0
    %256 = vmatpush1.bf16.msra.mxu0 0
    %257 = vmatprep.subr.bf16.mxu0 0
    %258 = vmatpush1.bf16.msra.mxu0 0
    %259 = vmatprep.subr.bf16.mxu0 0
    %260 = vmatpush1.bf16.msra.mxu0 0
    %261 = vmatprep.mubr.bf16.mxu0 0
    %262 = vmatmul.mubr.bf16.gmra.mrb[0].mxu0 %v227
    %v263 = vpop.f32.mrb[0].mxu0
    %v264 = vadd.f32 %v218, %v263
    %v265 = vpop.f32.mrb[0].mxu0
    %v266 = vpop.f32.mrb[0].mxu0
    %v267 = vadd.f32 %v218, %v266
    %v268 = vpop.f32.mrb[0].mxu0
    %269 = vdwg.mxu0
    %v270 = vmax.f32 %v264, 0.0
    %v271 = vmax.f32 %v267, 0.0
    %v272 = vpack.c.bf16 %v271, %v270
    %v273 = vld [vmem:[%s5] sm:$0xf]
    %v274 = vld [vmem:[%s5 + $0x4] sm:$0xf]
    %v275 = vld [vmem:[%s5 + $0x8] sm:$0xf]
    %v276 = vld [vmem:[%s5 + $0xc] sm:$0xf]
    %v281 = vunpack.c.l.b16 %v273
    %v282 = vunpack.c.l.b16 %v274
    %v283 = vunpack.c.l.b16 %v275
    %v284 = vunpack.c.l.b16 %v276
    %v285 = vpack.c.b16 %v282, %v281
    %v286 = vpack.c.b16 %v284, %v283
    %vm289 = vcmask 261120
    %v291 = vsel %vm289, %v272, 0
    %293 = vmatprep.subr.bf16.mxu0 0
    %294 = vmatpush1.bf16.msra.mxu0 %v285
    %295 = vmatprep.subr.bf16.mxu0 0
    %296 = vmatpush1.bf16.msra.mxu0 %v286
    %297 = vmatprep.subr.bf16.mxu0 0
    %298 = vmatpush1.bf16.msra.mxu0 0
    %299 = vmatprep.subr.bf16.mxu0 0
    %300 = vmatpush1.bf16.msra.mxu0 0
    %301 = vmatprep.subr.bf16.mxu0 0
    %302 = vmatpush1.bf16.msra.mxu0 0
    %303 = vmatprep.subr.bf16.mxu0 0
    %304 = vmatpush1.bf16.msra.mxu0 0
    %305 = vmatprep.subr.bf16.mxu0 0
    %306 = vmatpush1.bf16.msra.mxu0 0
    %307 = vmatprep.subr.bf16.mxu0 0
    %308 = vmatpush1.bf16.msra.mxu0 0
    %309 = vmatprep.subr.bf16.mxu0 0
    %310 = vmatpush1.bf16.msra.mxu0 0
    %311 = vmatprep.subr.bf16.mxu0 0
    %312 = vmatpush1.bf16.msra.mxu0 0
    %313 = vmatprep.subr.bf16.mxu0 0
    %314 = vmatpush1.bf16.msra.mxu0 0
    %315 = vmatprep.subr.bf16.mxu0 0
    %316 = vmatpush1.bf16.msra.mxu0 0
    %317 = vmatprep.subr.bf16.mxu0 0
    %318 = vmatpush1.bf16.msra.mxu0 0
    %319 = vmatprep.subr.bf16.mxu0 0
    %320 = vmatpush1.bf16.msra.mxu0 0
    %321 = vmatprep.subr.bf16.mxu0 0
    %322 = vmatpush1.bf16.msra.mxu0 0
    %323 = vmatprep.subr.bf16.mxu0 0
    %324 = vmatpush1.bf16.msra.mxu0 0
    %325 = vmatprep.mubr.bf16.mxu0 0
    %326 = vmatmul.mubr.bf16.gmra.mrb[0].mxu0 %v291
    %v327 = vpop.f32.mrb[0].mxu0
    %v328 = vadd.f32 0.0, %v327
    %v329 = vpop.f32.mrb[0].mxu0
    %v330 = vpop.f32.mrb[0].mxu0
    %v331 = vadd.f32 0.0, %v330
    %v332 = vpop.f32.mrb[0].mxu0
    %333 = vdwg.mxu0
    %v334 = vpack.c.bf16 %v331, %v328
    %v335 = vld [vmem:[#allocation10] sm:$0x1]
    %v337 = vlaneseq
    %v338 = vshrl.u32 %v337, 7
    %v339 = vsub.s32 0, %v338
    %v340 = vrot.slane %v335, %v339
    %342 = vmatprep.subr.bf16.mxu0 0
    %343 = vmatpush1.bf16.msra.mxu0 %v334
    %344 = vmatprep.subr.bf16.mxu0 0
    %345 = vmatpush1.bf16.msra.mxu0 0
    %346 = vmatprep.subr.bf16.mxu0 0
    %347 = vmatpush1.bf16.msra.mxu0 0
    %348 = vmatprep.subr.bf16.mxu0 0
    %349 = vmatpush1.bf16.msra.mxu0 0
    %350 = vmatprep.subr.bf16.mxu0 0
    %351 = vmatpush1.bf16.msra.mxu0 0
    %352 = vmatprep.subr.bf16.mxu0 0
    %353 = vmatpush1.bf16.msra.mxu0 0
    %354 = vmatprep.subr.bf16.mxu0 0
    %355 = vmatpush1.bf16.msra.mxu0 0
    %356 = vmatprep.subr.bf16.mxu0 0
    %357 = vmatpush1.bf16.msra.mxu0 0
    %358 = vmatprep.subr.bf16.mxu0 0
    %359 = vmatpush1.bf16.msra.mxu0 0
    %360 = vmatprep.subr.bf16.mxu0 0
    %361 = vmatpush1.bf16.msra.mxu0 0
    %362 = vmatprep.subr.bf16.mxu0 0
    %363 = vmatpush1.bf16.msra.mxu0 0
    %364 = vmatprep.subr.bf16.mxu0 0
    %365 = vmatpush1.bf16.msra.mxu0 0
    %366 = vmatprep.subr.bf16.mxu0 0
    %367 = vmatpush1.bf16.msra.mxu0 0
    %368 = vmatprep.subr.bf16.mxu0 0
    %369 = vmatpush1.bf16.msra.mxu0 0
    %370 = vmatprep.subr.bf16.mxu0 0
    %371 = vmatpush1.bf16.msra.mxu0 0
    %372 = vmatprep.subr.bf16.mxu0 0
    %373 = vmatpush1.bf16.msra.mxu0 0
    %374 = vmatprep.mubr.bf16.mxu0 0
    %375 = vmatmul.mubr.bf16.gmra.mrb[0].mxu0 %v227
    %v376 = vpop.f32.mrb[0].mxu0
    %v377 = vadd.f32 %v340, %v376
    %v378 = vpop.f32.mrb[0].mxu0
    %v379 = vpop.f32.mrb[0].mxu0
    %v380 = vadd.f32 %v340, %v379
    %v381 = vpop.f32.mrb[0].mxu0
    %382 = vdwg.mxu0
    %v383 = vmax.f32 %v377, 0.0
    %v384 = vmax.f32 %v380, 0.0
    %v385 = vpack.c.bf16 %v384, %v383
    %v386 = vld [vmem:[%s7] sm:$0xf]
    %v387 = vld [vmem:[%s7 + $0x4] sm:$0xf]
    %v388 = vld [vmem:[%s7 + $0x8] sm:$0xf]
    %v389 = vld [vmem:[%s7 + $0xc] sm:$0xf]
    %v394 = vunpack.c.l.b16 %v386
    %v395 = vunpack.c.l.b16 %v387
    %v396 = vunpack.c.l.b16 %v388
    %v397 = vunpack.c.l.b16 %v389
    %v398 = vpack.c.b16 %v395, %v394
    %v399 = vpack.c.b16 %v397, %v396
    %v403 = vsel %vm289, %v385, 0
    %405 = vmatprep.subr.bf16.mxu0 0
    %406 = vmatpush1.bf16.msra.mxu0 %v398
    %407 = vmatprep.subr.bf16.mxu0 0
    %408 = vmatpush1.bf16.msra.mxu0 %v399
    %409 = vmatprep.subr.bf16.mxu0 0
    %410 = vmatpush1.bf16.msra.mxu0 0
    %411 = vmatprep.subr.bf16.mxu0 0
    %412 = vmatpush1.bf16.msra.mxu0 0
    %413 = vmatprep.subr.bf16.mxu0 0
    %414 = vmatpush1.bf16.msra.mxu0 0
    %415 = vmatprep.subr.bf16.mxu0 0
    %416 = vmatpush1.bf16.msra.mxu0 0
    %417 = vmatprep.subr.bf16.mxu0 0
    %418 = vmatpush1.bf16.msra.mxu0 0
    %419 = vmatprep.subr.bf16.mxu0 0
    %420 = vmatpush1.bf16.msra.mxu0 0
    %421 = vmatprep.subr.bf16.mxu0 0
    %422 = vmatpush1.bf16.msra.mxu0 0
    %423 = vmatprep.subr.bf16.mxu0 0
    %424 = vmatpush1.bf16.msra.mxu0 0
    %425 = vmatprep.subr.bf16.mxu0 0
    %426 = vmatpush1.bf16.msra.mxu0 0
    %427 = vmatprep.subr.bf16.mxu0 0
    %428 = vmatpush1.bf16.msra.mxu0 0
    %429 = vmatprep.subr.bf16.mxu0 0
    %430 = vmatpush1.bf16.msra.mxu0 0
    %431 = vmatprep.subr.bf16.mxu0 0
    %432 = vmatpush1.bf16.msra.mxu0 0
    %433 = vmatprep.subr.bf16.mxu0 0
    %434 = vmatpush1.bf16.msra.mxu0 0
    %435 = vmatprep.subr.bf16.mxu0 0
    %436 = vmatpush1.bf16.msra.mxu0 0
    %437 = vmatprep.mubr.bf16.mxu0 0
    %438 = vmatmul.mubr.bf16.gmra.mrb[0].mxu0 %v403
    %v439 = vpop.f32.mrb[0].mxu0
    %v440 = vadd.f32 0.0, %v439
    %v441 = vpop.f32.mrb[0].mxu0
    %v442 = vpop.f32.mrb[0].mxu0
    %v443 = vadd.f32 0.0, %v442
    %v444 = vpop.f32.mrb[0].mxu0
    %445 = vdwg.mxu0
    %v446 = vpack.c.bf16 %v443, %v440
    %v447 = vld [vmem:[%s8] sm:$0x1]
    %v449 = vlaneseq
    %v450 = vshrl.u32 %v449, 7
    %v451 = vsub.s32 0, %v450
    %v452 = vrot.slane %v447, %v451
    %454 = vmatprep.subr.bf16.mxu0 0
    %455 = vmatpush1.bf16.msra.mxu0 %v446
    %456 = vmatprep.subr.bf16.mxu0 0
    %457 = vmatpush1.bf16.msra.mxu0 0
    %458 = vmatprep.subr.bf16.mxu0 0
    %459 = vmatpush1.bf16.msra.mxu0 0
    %460 = vmatprep.subr.bf16.mxu0 0
    %461 = vmatpush1.bf16.msra.mxu0 0
    %462 = vmatprep.subr.bf16.mxu0 0
    %463 = vmatpush1.bf16.msra.mxu0 0
    %464 = vmatprep.subr.bf16.mxu0 0
    %465 = vmatpush1.bf16.msra.mxu0 0
    %466 = vmatprep.subr.bf16.mxu0 0
    %467 = vmatpush1.bf16.msra.mxu0 0
    %468 = vmatprep.subr.bf16.mxu0 0
    %469 = vmatpush1.bf16.msra.mxu0 0
    %470 = vmatprep.subr.bf16.mxu0 0
    %471 = vmatpush1.bf16.msra.mxu0 0
    %472 = vmatprep.subr.bf16.mxu0 0
    %473 = vmatpush1.bf16.msra.mxu0 0
    %474 = vmatprep.subr.bf16.mxu0 0
    %475 = vmatpush1.bf16.msra.mxu0 0
    %476 = vmatprep.subr.bf16.mxu0 0
    %477 = vmatpush1.bf16.msra.mxu0 0
    %478 = vmatprep.subr.bf16.mxu0 0
    %479 = vmatpush1.bf16.msra.mxu0 0
    %480 = vmatprep.subr.bf16.mxu0 0
    %481 = vmatpush1.bf16.msra.mxu0 0
    %482 = vmatprep.subr.bf16.mxu0 0
    %483 = vmatpush1.bf16.msra.mxu0 0
    %484 = vmatprep.subr.bf16.mxu0 0
    %485 = vmatpush1.bf16.msra.mxu0 0
    %486 = vmatprep.mubr.bf16.mxu0 0
    %487 = vmatmul.mubr.bf16.gmra.mrb[0].mxu0 %v227
    %v488 = vpop.f32.mrb[0].mxu0
    %v489 = vadd.f32 %v452, %v488
    %v490 = vpop.f32.mrb[0].mxu0
    %v491 = vpop.f32.mrb[0].mxu0
    %v492 = vadd.f32 %v452, %v491
    %v493 = vpop.f32.mrb[0].mxu0
    %494 = vdwg.mxu0
    %v495 = vmax.f32 %v489, 0.0
    %v496 = vmax.f32 %v492, 0.0
    %v497 = vpack.c.bf16 %v496, %v495
    %v498 = vld [vmem:[#allocation11] sm:$0xff]
    %v499 = vld [vmem:[#allocation11 + $0x8] sm:$0xff]
    %v500 = vld [vmem:[#allocation11 + $0x10] sm:$0xff]
    %v501 = vld [vmem:[#allocation11 + $0x18] sm:$0xff]
    %v502 = vld [vmem:[#allocation11 + $0x20] sm:$0xff]
    %v503 = vld [vmem:[#allocation11 + $0x28] sm:$0xff]
    %v504 = vld [vmem:[#allocation11 + $0x30] sm:$0xff]
    %v505 = vld [vmem:[#allocation11 + $0x38] sm:$0xff]
    %v506 = vld [vmem:[#allocation11 + $0x40] sm:$0xff]
    %v507 = vld [vmem:[#allocation11 + $0x48] sm:$0xff]
    %v508 = vld [vmem:[#allocation11 + $0x50] sm:$0xff]
    %v509 = vld [vmem:[#allocation11 + $0x58] sm:$0xff]
    %v510 = vld [vmem:[#allocation11 + $0x60] sm:$0xff]
    %v511 = vld [vmem:[#allocation11 + $0x68] sm:$0xff]
    %v512 = vld [vmem:[#allocation11 + $0x70] sm:$0xff]
    %v513 = vld [vmem:[#allocation11 + $0x78] sm:$0xff]
    %v530 = vunpack.c.l.b16 %v498
    %v531 = vunpack.c.h.b16 %v498
    %v532 = vunpack.c.l.b16 %v499
    %v533 = vunpack.c.h.b16 %v499
    %v534 = vunpack.c.l.b16 %v500
    %v535 = vunpack.c.h.b16 %v500
    %v536 = vunpack.c.l.b16 %v501
    %v537 = vunpack.c.h.b16 %v501
    %v538 = vunpack.c.l.b16 %v502
    %v539 = vunpack.c.h.b16 %v502
    %v540 = vunpack.c.l.b16 %v503
    %v541 = vunpack.c.h.b16 %v503
    %v542 = vunpack.c.l.b16 %v504
    %v543 = vunpack.c.h.b16 %v504
    %v544 = vunpack.c.l.b16 %v505
    %v545 = vunpack.c.h.b16 %v505
    %v546 = vunpack.c.l.b16 %v506
    %v547 = vunpack.c.h.b16 %v506
    %v548 = vunpack.c.l.b16 %v507
    %v549 = vunpack.c.h.b16 %v507
    %v550 = vunpack.c.l.b16 %v508
    %v551 = vunpack.c.h.b16 %v508
    %v552 = vunpack.c.l.b16 %v509
    %v553 = vunpack.c.h.b16 %v509
    %v554 = vunpack.c.l.b16 %v510
    %v555 = vunpack.c.h.b16 %v510
    %v556 = vunpack.c.l.b16 %v511
    %v557 = vunpack.c.h.b16 %v511
    %v558 = vunpack.c.l.b16 %v512
    %v559 = vunpack.c.h.b16 %v512
    %v560 = vunpack.c.l.b16 %v513
    %v561 = vunpack.c.h.b16 %v513
    %v562 = vpack.c.b16 %v532, %v530
    %v563 = vpack.c.b16 %v533, %v531
    %v564 = vpack.c.b16 %v536, %v534
    %v565 = vpack.c.b16 %v537, %v535
    %v566 = vpack.c.b16 %v540, %v538
    %v567 = vpack.c.b16 %v541, %v539
    %v568 = vpack.c.b16 %v544, %v542
    %v569 = vpack.c.b16 %v545, %v543
    %v570 = vpack.c.b16 %v548, %v546
    %v571 = vpack.c.b16 %v549, %v547
    %v572 = vpack.c.b16 %v552, %v550
    %v573 = vpack.c.b16 %v553, %v551
    %v574 = vpack.c.b16 %v556, %v554
    %v575 = vpack.c.b16 %v557, %v555
    %v576 = vpack.c.b16 %v560, %v558
    %v577 = vpack.c.b16 %v561, %v559
    %594 = vmatprep.subr.bf16.mxu0 %v563
    %595 = vmatpush1.bf16.msra.mxu0 %v562
    %596 = vmatprep.subr.bf16.mxu0 %v565
    %597 = vmatpush1.bf16.msra.mxu0 %v564
    %598 = vmatprep.subr.bf16.mxu0 %v567
    %599 = vmatpush1.bf16.msra.mxu0 %v566
    %600 = vmatprep.subr.bf16.mxu0 %v569
    %601 = vmatpush1.bf16.msra.mxu0 %v568
    %602 = vmatprep.subr.bf16.mxu0 %v571
    %603 = vmatpush1.bf16.msra.mxu0 %v570
    %604 = vmatprep.subr.bf16.mxu0 %v573
    %605 = vmatpush1.bf16.msra.mxu0 %v572
    %606 = vmatprep.subr.bf16.mxu0 %v575
    %607 = vmatpush1.bf16.msra.mxu0 %v574
    %608 = vmatprep.subr.bf16.mxu0 %v577
    %609 = vmatpush1.bf16.msra.mxu0 %v576
    %610 = vmatprep.subr.bf16.mxu0 0
    %611 = vmatpush1.bf16.msra.mxu0 0
    %612 = vmatprep.subr.bf16.mxu0 0
    %613 = vmatpush1.bf16.msra.mxu0 0
    %614 = vmatprep.subr.bf16.mxu0 0
    %615 = vmatpush1.bf16.msra.mxu0 0
    %616 = vmatprep.subr.bf16.mxu0 0
    %617 = vmatpush1.bf16.msra.mxu0 0
    %618 = vmatprep.subr.bf16.mxu0 0
    %619 = vmatpush1.bf16.msra.mxu0 0
    %620 = vmatprep.subr.bf16.mxu0 0
    %621 = vmatpush1.bf16.msra.mxu0 0
    %622 = vmatprep.subr.bf16.mxu0 0
    %623 = vmatpush1.bf16.msra.mxu0 0
    %624 = vmatprep.subr.bf16.mxu0 0
    %625 = vmatpush1.bf16.msra.mxu0 0
    %626 = vmatprep.mubr.bf16.mxu0 0
    %627 = vmatmul.mubr.bf16.gmra.mrb[0].mxu0 %v497
    %v628 = vpop.f32.mrb[0].mxu0
    %v629 = vadd.f32 0.0, %v628
    %v630 = vpop.f32.mrb[0].mxu0
    %v631 = vadd.f32 0.0, %v630
    %v632 = vpop.f32.mrb[0].mxu0
    %v633 = vadd.f32 0.0, %v632
    %v634 = vpop.f32.mrb[0].mxu0
    %v635 = vadd.f32 0.0, %v634
    %636 = vdwg.mxu0
    %v637 = vpack.c.bf16 %v633, %v629
    %v638 = vpack.c.bf16 %v635, %v631
    %v639 = vld [vmem:[%s10] sm:$0x3]
    %v641 = vlaneseq
    %v642 = vshrl.u32 %v641, 7
    %v643 = vsub.s32 0, %v642
    %v644 = vrot.slane %v639, %v643
    %v645 = vlaneseq
    %v646 = vshrl.u32 %v645, 7
    %v647 = vsub.s32 1, %v646
    %v648 = vrot.slane %v639, %v647
    %651 = vmatprep.subr.bf16.mxu0 %v638
    %652 = vmatpush1.bf16.msra.mxu0 %v637
    %653 = vmatprep.subr.bf16.mxu0 0
    %654 = vmatpush1.bf16.msra.mxu0 0
    %655 = vmatprep.subr.bf16.mxu0 0
    %656 = vmatpush1.bf16.msra.mxu0 0
    %657 = vmatprep.subr.bf16.mxu0 0
    %658 = vmatpush1.bf16.msra.mxu0 0
    %659 = vmatprep.subr.bf16.mxu0 0
    %660 = vmatpush1.bf16.msra.mxu0 0
    %661 = vmatprep.subr.bf16.mxu0 0
    %662 = vmatpush1.bf16.msra.mxu0 0
    %663 = vmatprep.subr.bf16.mxu0 0
    %664 = vmatpush1.bf16.msra.mxu0 0
    %665 = vmatprep.subr.bf16.mxu0 0
    %666 = vmatpush1.bf16.msra.mxu0 0
    %667 = vmatprep.subr.bf16.mxu0 0
    %668 = vmatpush1.bf16.msra.mxu0 0
    %669 = vmatprep.subr.bf16.mxu0 0
    %670 = vmatpush1.bf16.msra.mxu0 0
    %671 = vmatprep.subr.bf16.mxu0 0
    %672 = vmatpush1.bf16.msra.mxu0 0
    %673 = vmatprep.subr.bf16.mxu0 0
    %674 = vmatpush1.bf16.msra.mxu0 0
    %675 = vmatprep.subr.bf16.mxu0 0
    %676 = vmatpush1.bf16.msra.mxu0 0
    %677 = vmatprep.subr.bf16.mxu0 0
    %678 = vmatpush1.bf16.msra.mxu0 0
    %679 = vmatprep.subr.bf16.mxu0 0
    %680 = vmatpush1.bf16.msra.mxu0 0
    %681 = vmatprep.subr.bf16.mxu0 0
    %682 = vmatpush1.bf16.msra.mxu0 0
    %683 = vmatprep.mubr.bf16.mxu0 0
    %684 = vmatmul.mubr.bf16.gmra.mrb[0].mxu0 %v227
    %v685 = vpop.f32.mrb[0].mxu0
    %v686 = vadd.f32 %v644, %v685
    %v687 = vpop.f32.mrb[0].mxu0
    %v688 = vadd.f32 %v648, %v687
    %v689 = vpop.f32.mrb[0].mxu0
    %v690 = vadd.f32 %v644, %v689
    %v691 = vpop.f32.mrb[0].mxu0
    %v692 = vadd.f32 %v648, %v691
    %693 = vdwg.mxu0
    %v694 = vmax.f32 %v686, 0.0
    %v695 = vmax.f32 %v688, 0.0
    %v696 = vmax.f32 %v690, 0.0
    %v697 = vmax.f32 %v692, 0.0
    %v698 = vpack.c.bf16 %v696, %v694
    %v699 = vpack.c.bf16 %v697, %v695
    %v700 = vld [vmem:[#allocation5] sm:$0xf]
    %v702 = vsel %vm225, %v700, 0
    %704 = vmatprep.subr.bf16.mxu0 %v699
    %705 = vmatpush1.bf16.msra.mxu0 %v698
    %706 = vmatprep.subr.bf16.mxu0 0
    %707 = vmatpush1.bf16.msra.mxu0 0
    %708 = vmatprep.subr.bf16.mxu0 0
    %709 = vmatpush1.bf16.msra.mxu0 0
    %710 = vmatprep.subr.bf16.mxu0 0
    %711 = vmatpush1.bf16.msra.mxu0 0
    %712 = vmatprep.subr.bf16.mxu0 0
    %713 = vmatpush1.bf16.msra.mxu0 0
    %714 = vmatprep.subr.bf16.mxu0 0
    %715 = vmatpush1.bf16.msra.mxu0 0
    %716 = vmatprep.subr.bf16.mxu0 0
    %717 = vmatpush1.bf16.msra.mxu0 0
    %718 = vmatprep.subr.bf16.mxu0 0
    %719 = vmatpush1.bf16.msra.mxu0 0
    %720 = vmatprep.subr.bf16.mxu0 0
    %721 = vmatpush1.bf16.msra.mxu0 0
    %722 = vmatprep.subr.bf16.mxu0 0
    %723 = vmatpush1.bf16.msra.mxu0 0
    %724 = vmatprep.subr.bf16.mxu0 0
    %725 = vmatpush1.bf16.msra.mxu0 0
    %726 = vmatprep.subr.bf16.mxu0 0
    %727 = vmatpush1.bf16.msra.mxu0 0
    %728 = vmatprep.subr.bf16.mxu0 0
    %729 = vmatpush1.bf16.msra.mxu0 0
    %730 = vmatprep.subr.bf16.mxu0 0
    %731 = vmatpush1.bf16.msra.mxu0 0
    %732 = vmatprep.subr.bf16.mxu0 0
    %733 = vmatpush1.bf16.msra.mxu0 0
    %734 = vmatprep.subr.bf16.mxu0 0
    %735 = vmatpush1.bf16.msra.mxu0 0
    %736 = vmatprep.mubr.bf16.mxu0 0
    %737 = vmatmul.mubr.bf16.gmra.mrb[0].mxu0 %v702
    %v738 = vpop.f32.mrb[0].mxu0
    %v739 = vadd.f32 0.0, %v738
    %v740 = vpop.f32.mrb[0].mxu0
    %v741 = vadd.f32 0.0, %v740
    %v742 = vpop.f32.mrb[0].mxu0
    %v743 = vpop.f32.mrb[0].mxu0
    %744 = vdwg.mxu0
    %v745 = vpack.c.bf16 %v739, %v739
    %v746 = vpack.c.bf16 %v741, %v741
    %v747 = vld [vmem:[#allocation13] sm:$0xf]
    %v748 = vld [vmem:[#allocation13 + $0x4] sm:$0xf]
    %v749 = vld [vmem:[#allocation13 + $0x8] sm:$0xf]
    %v750 = vld [vmem:[#allocation13 + $0xc] sm:$0xf]
    %v751 = vld [vmem:[#allocation13 + $0x10] sm:$0xf]
    %v752 = vld [vmem:[#allocation13 + $0x14] sm:$0xf]
    %v753 = vld [vmem:[#allocation13 + $0x18] sm:$0xf]
    %v754 = vld [vmem:[#allocation13 + $0x1c] sm:$0xf]
    %v755 = vld [vmem:[#allocation13 + $0x20] sm:$0xf]
    %v756 = vld [vmem:[#allocation13 + $0x24] sm:$0xf]
    %v757 = vld [vmem:[#allocation13 + $0x28] sm:$0xf]
    %v758 = vld [vmem:[#allocation13 + $0x2c] sm:$0xf]
    %v759 = vld [vmem:[#allocation13 + $0x30] sm:$0xf]
    %v760 = vld [vmem:[#allocation13 + $0x34] sm:$0xf]
    %v761 = vld [vmem:[#allocation13 + $0x38] sm:$0xf]
    %v762 = vld [vmem:[#allocation13 + $0x3c] sm:$0xf]
    %v763 = vld [vmem:[#allocation13 + $0x40] sm:$0xf]
    %v764 = vld [vmem:[#allocation13 + $0x44] sm:$0xf]
    %v765 = vld [vmem:[#allocation13 + $0x48] sm:$0xf]
    %v766 = vld [vmem:[#allocation13 + $0x4c] sm:$0xf]
    %v767 = vld [vmem:[#allocation13 + $0x50] sm:$0xf]
    %v768 = vld [vmem:[#allocation13 + $0x54] sm:$0xf]
    %v769 = vld [vmem:[#allocation13 + $0x58] sm:$0xf]
    %v770 = vld [vmem:[#allocation13 + $0x5c] sm:$0xf]
    %v771 = vld [vmem:[#allocation13 + $0x60] sm:$0xf]
    %v772 = vld [vmem:[#allocation13 + $0x64] sm:$0xf]
    %v773 = vld [vmem:[#allocation13 + $0x68] sm:$0xf]
    %v774 = vld [vmem:[#allocation13 + $0x6c] sm:$0xf]
    %v775 = vld [vmem:[#allocation13 + $0x70] sm:$0xf]
    %v776 = vld [vmem:[#allocation13 + $0x74] sm:$0xf]
    %v777 = vld [vmem:[#allocation13 + $0x78] sm:$0xf]
    %v778 = vld [vmem:[#allocation13 + $0x7c] sm:$0xf]
    %v779 = vld [vmem:[%s12] sm:$0x1]
    %v781 = vlaneseq
    %v782 = vshrl.u32 %v781, 7
    %v783 = vsub.s32 0, %v782
    %v784 = vrot.slane %v779, %v783
    %v818 = vunpack.c.l.b16 %v747
    %v819 = vunpack.c.l.b16 %v748
    %v820 = vunpack.c.l.b16 %v749
    %v821 = vunpack.c.l.b16 %v750
    %v822 = vunpack.c.l.b16 %v751
    %v823 = vunpack.c.l.b16 %v752
    %v824 = vunpack.c.l.b16 %v753
    %v825 = vunpack.c.l.b16 %v754
    %v826 = vunpack.c.l.b16 %v755
    %v827 = vunpack.c.l.b16 %v756
    %v828 = vunpack.c.l.b16 %v757
    %v829 = vunpack.c.l.b16 %v758
    %v830 = vunpack.c.l.b16 %v759
    %v831 = vunpack.c.l.b16 %v760
    %v832 = vunpack.c.l.b16 %v761
    %v833 = vunpack.c.l.b16 %v762
    %v834 = vunpack.c.l.b16 %v763
    %v835 = vunpack.c.l.b16 %v764
    %v836 = vunpack.c.l.b16 %v765
    %v837 = vunpack.c.l.b16 %v766
    %v838 = vunpack.c.l.b16 %v767
    %v839 = vunpack.c.l.b16 %v768
    %v840 = vunpack.c.l.b16 %v769
    %v841 = vunpack.c.l.b16 %v770
    %v842 = vunpack.c.l.b16 %v771
    %v843 = vunpack.c.l.b16 %v772
    %v844 = vunpack.c.l.b16 %v773
    %v845 = vunpack.c.l.b16 %v774
    %v846 = vunpack.c.l.b16 %v775
    %v847 = vunpack.c.l.b16 %v776
    %v848 = vunpack.c.l.b16 %v777
    %v849 = vunpack.c.l.b16 %v778
    %v850 = vpack.c.b16 %v819, %v818
    %v851 = vpack.c.b16 %v821, %v820
    %v852 = vpack.c.b16 %v823, %v822
    %v853 = vpack.c.b16 %v825, %v824
    %v854 = vpack.c.b16 %v827, %v826
    %v855 = vpack.c.b16 %v829, %v828
    %v856 = vpack.c.b16 %v831, %v830
    %v857 = vpack.c.b16 %v833, %v832
    %v858 = vpack.c.b16 %v835, %v834
    %v859 = vpack.c.b16 %v837, %v836
    %v860 = vpack.c.b16 %v839, %v838
    %v861 = vpack.c.b16 %v841, %v840
    %v862 = vpack.c.b16 %v843, %v842
    %v863 = vpack.c.b16 %v845, %v844
    %v864 = vpack.c.b16 %v847, %v846
    %v865 = vpack.c.b16 %v849, %v848
    %882 = vmatprep.subr.bf16.mxu0 0
    %883 = vmatpush1.bf16.msra.mxu0 %v850
    %884 = vmatprep.subr.bf16.mxu0 0
    %885 = vmatpush1.bf16.msra.mxu0 %v851
    %886 = vmatprep.subr.bf16.mxu0 0
    %887 = vmatpush1.bf16.msra.mxu0 %v852
    %888 = vmatprep.subr.bf16.mxu0 0
    %889 = vmatpush1.bf16.msra.mxu0 %v853
    %890 = vmatprep.subr.bf16.mxu0 0
    %891 = vmatpush1.bf16.msra.mxu0 %v854
    %892 = vmatprep.subr.bf16.mxu0 0
    %893 = vmatpush1.bf16.msra.mxu0 %v855
    %894 = vmatprep.subr.bf16.mxu0 0
    %895 = vmatpush1.bf16.msra.mxu0 %v856
    %896 = vmatprep.subr.bf16.mxu0 0
    %897 = vmatpush1.bf16.msra.mxu0 %v857
    %898 = vmatprep.subr.bf16.mxu0 0
    %899 = vmatpush1.bf16.msra.mxu0 %v858
    %900 = vmatprep.subr.bf16.mxu0 0
    %901 = vmatpush1.bf16.msra.mxu0 %v859
    %902 = vmatprep.subr.bf16.mxu0 0
    %903 = vmatpush1.bf16.msra.mxu0 %v860
    %904 = vmatprep.subr.bf16.mxu0 0
    %905 = vmatpush1.bf16.msra.mxu0 %v861
    %906 = vmatprep.subr.bf16.mxu0 0
    %907 = vmatpush1.bf16.msra.mxu0 %v862
    %908 = vmatprep.subr.bf16.mxu0 0
    %909 = vmatpush1.bf16.msra.mxu0 %v863
    %910 = vmatprep.subr.bf16.mxu0 0
    %911 = vmatpush1.bf16.msra.mxu0 %v864
    %912 = vmatprep.subr.bf16.mxu0 0
    %913 = vmatpush1.bf16.msra.mxu0 %v865
    %914 = vmatprep.mubr.bf16.mxu0 %v746
    %915 = vmatmul.mubr.bf16.gmra.mrb[0].mxu0 %v745
    %v916 = vpop.f32.mrb[0].mxu0
    %v917 = vadd.f32 %v784, %v916
    %v918 = vpop.f32.mrb[0].mxu0
    %v919 = vpop.f32.mrb[0].mxu0
    %v920 = vpop.f32.mrb[0].mxu0
    %921 = vdwg.mxu0
    %v922 = vmax.f32 %v917, 0.0
    %v923 = vpack.c.bf16 %v922, %v922
    %v924 = vld [vmem:[#allocation14] sm:$0xf]
    %v925 = vld [vmem:[#allocation14 + $0x4] sm:$0xf]
    %v926 = vld [vmem:[#allocation14 + $0x8] sm:$0xf]
    %v927 = vld [vmem:[#allocation14 + $0xc] sm:$0xf]
    %v928 = vld [vmem:[#allocation14 + $0x10] sm:$0xf]
    %v929 = vld [vmem:[#allocation14 + $0x14] sm:$0xf]
    %v930 = vld [vmem:[#allocation14 + $0x18] sm:$0xf]
    %v931 = vld [vmem:[#allocation14 + $0x1c] sm:$0xf]
    %v932 = vld [vmem:[#allocation14 + $0x20] sm:$0xf]
    %v933 = vld [vmem:[#allocation14 + $0x24] sm:$0xf]
    %v934 = vld [vmem:[#allocation14 + $0x28] sm:$0xf]
    %v935 = vld [vmem:[#allocation14 + $0x2c] sm:$0xf]
    %v936 = vld [vmem:[#allocation14 + $0x30] sm:$0xf]
    %v937 = vld [vmem:[#allocation14 + $0x34] sm:$0xf]
    %v938 = vld [vmem:[#allocation14 + $0x38] sm:$0xf]
    %v939 = vld [vmem:[#allocation14 + $0x3c] sm:$0xf]
    %v940 = vld [vmem:[%s14] sm:$0x1]
    %v942 = vlaneseq
    %v943 = vshrl.u32 %v942, 7
    %v944 = vsub.s32 0, %v943
    %v945 = vrot.slane %v940, %v944
    %v963 = vunpack.c.l.b16 %v924
    %v964 = vunpack.c.l.b16 %v925
    %v965 = vunpack.c.l.b16 %v926
    %v966 = vunpack.c.l.b16 %v927
    %v967 = vunpack.c.l.b16 %v928
    %v968 = vunpack.c.l.b16 %v929
    %v969 = vunpack.c.l.b16 %v930
    %v970 = vunpack.c.l.b16 %v931
    %v971 = vunpack.c.l.b16 %v932
    %v972 = vunpack.c.l.b16 %v933
    %v973 = vunpack.c.l.b16 %v934
    %v974 = vunpack.c.l.b16 %v935
    %v975 = vunpack.c.l.b16 %v936
    %v976 = vunpack.c.l.b16 %v937
    %v977 = vunpack.c.l.b16 %v938
    %v978 = vunpack.c.l.b16 %v939
    %v979 = vpack.c.b16 %v964, %v963
    %v980 = vpack.c.b16 %v966, %v965
    %v981 = vpack.c.b16 %v968, %v967
    %v982 = vpack.c.b16 %v970, %v969
    %v983 = vpack.c.b16 %v972, %v971
    %v984 = vpack.c.b16 %v974, %v973
    %v985 = vpack.c.b16 %v976, %v975
    %v986 = vpack.c.b16 %v978, %v977
    %995 = vmatprep.subr.bf16.mxu0 0
    %996 = vmatpush1.bf16.msra.mxu0 %v979
    %997 = vmatprep.subr.bf16.mxu0 0
    %998 = vmatpush1.bf16.msra.mxu0 %v980
    %999 = vmatprep.subr.bf16.mxu0 0
    %1000 = vmatpush1.bf16.msra.mxu0 %v981
    %1001 = vmatprep.subr.bf16.mxu0 0
    %1002 = vmatpush1.bf16.msra.mxu0 %v982
    %1003 = vmatprep.subr.bf16.mxu0 0
    %1004 = vmatpush1.bf16.msra.mxu0 %v983
    %1005 = vmatprep.subr.bf16.mxu0 0
    %1006 = vmatpush1.bf16.msra.mxu0 %v984
    %1007 = vmatprep.subr.bf16.mxu0 0
    %1008 = vmatpush1.bf16.msra.mxu0 %v985
    %1009 = vmatprep.subr.bf16.mxu0 0
    %1010 = vmatpush1.bf16.msra.mxu0 %v986
    %1011 = vmatprep.subr.bf16.mxu0 0
    %1012 = vmatpush1.bf16.msra.mxu0 0
    %1013 = vmatprep.subr.bf16.mxu0 0
    %1014 = vmatpush1.bf16.msra.mxu0 0
    %1015 = vmatprep.subr.bf16.mxu0 0
    %1016 = vmatpush1.bf16.msra.mxu0 0
    %1017 = vmatprep.subr.bf16.mxu0 0
    %1018 = vmatpush1.bf16.msra.mxu0 0
    %1019 = vmatprep.subr.bf16.mxu0 0
    %1020 = vmatpush1.bf16.msra.mxu0 0
    %1021 = vmatprep.subr.bf16.mxu0 0
    %1022 = vmatpush1.bf16.msra.mxu0 0
    %1023 = vmatprep.subr.bf16.mxu0 0
    %1024 = vmatpush1.bf16.msra.mxu0 0
    %1025 = vmatprep.subr.bf16.mxu0 0
    %1026 = vmatpush1.bf16.msra.mxu0 0
    %1027 = vmatprep.mubr.bf16.mxu0 0
    %1028 = vmatmul.mubr.bf16.gmra.mrb[0].mxu0 %v923
    %v1029 = vpop.f32.mrb[0].mxu0
    %v1030 = vadd.f32 %v945, %v1029
    %v1031 = vpop.f32.mrb[0].mxu0
    %v1032 = vpop.f32.mrb[0].mxu0
    %v1033 = vpop.f32.mrb[0].mxu0
    %1034 = vdwg.mxu0
    %1035 = vst [vmem:[#allocation16] sm:$0xff] %v1030
    // Predicated region
    $region94: #{tpu_custom_call.1} parent=1 // pred_check
      _
    $region95: #{tpu_custom_call.1} parent=1 // pred_check_branch
      %1037 = sbr.rel (0) target = $region97
    $region96: #{tpu_custom_call.1} parent=1 // pred_region
      %s1039 = ssub.s32 128, 128
      %1040 = vsyncadd [#allocation4], %s1039
      %s1042 = sshll.u32 [#allocation16], 4
      %s1043 = int_to_ptr.vmem [resolvable:$true] %s1042
      %1045 = dma.vmem_to_hbm [thread:$0]  %s1043, 128, %s15, [#allocation4]
    $region97: #{tpu_custom_call.1} parent=1 // pred_fallthru
      _
    // Predicated region
    $region98: #{tpu_custom_call.1} parent=1 // pred_check
      _
    $region99: #{tpu_custom_call.1} parent=1 // pred_check_branch
      %1047 = sbr.rel (0) target = $region101
    $region100: #{tpu_custom_call.1} parent=1 // pred_region
      %1048 = dma.done [#allocation4], 128
    $region101: #{tpu_custom_call.1} parent=1 // pred_fallthru
      _
    %1049 = vsyncpa [#allocation3], 1
    %1050 = vsyncpa [#allocation6], 1
    %1051 = vsyncpa [#allocation9], 1
    %1052 = vsyncpa [#allocation12], 1
    %1053 = vsyncpa [#allocation15], 1
    %1054 = vsyncpa [#allocation4], 1

</llo_original>
